<compile_context>
chip_gen: v5e
topology: v5e:2x2
jax: 0.10.0
libtpu: 0.0.40
codegen_flags: <defaults>
</compile_context>

<pallas_src>
import numpy as np
import jax
import jax.numpy as jnp
from jax.experimental import pallas as pl
from jax.experimental.pallas import tpu as pltpu

# ---------------------------------------------------------------------------
# "cfg" — deterministic, in-script configuration (YOLOv2 / VOC style).
# ---------------------------------------------------------------------------
ANCHOR_BOX = [(1.3221, 1.73145), (3.19275, 4.00944), (5.05587, 8.09892),
              (9.47112, 4.84053), (11.2364, 10.0071)]
NUM_CLASSES = 20
LAMBDA_COORD = 5.0
LAMBDA_OBJ = 5.0
LAMBDA_NOOBJ = 1.0
LAMBDA_CLS = 1.0

A = len(ANCHOR_BOX)          # anchors per cell
C = 5 + NUM_CLASSES          # features per anchor: [cls 0:20, conf, x, y, w, h]


# ---------------------------------------------------------------------------
# Shared math (used by the Pallas kernel on a tile and by the pure-JAX ref).
# Everything is lane-dense: L = number of grid cells in the tile.
# ---------------------------------------------------------------------------
def _loss_lane_sums(load_feat, load_cls, tgt, anc):
    """Per-cell (per-lane) partial loss sums.

    load_feat(k) -> (A, L): feature row k (k in [NC .. NC+4]) of every anchor.
    load_cls(a)  -> (NC, L): class logits of anchor a.
    tgt          -> (C, L) ref/array: per-cell target rows.
    anc          -> (A, 2) ref/array: anchor (w, h).
    Returns four (1, L) arrays: box, conf, noobj, cls partial sums per cell.
    """
    nc, na = NUM_CLASSES, A
    f32 = jnp.float32

    # Targets (shared across anchors), each (1, L).
    tgt_conf = tgt[nc:nc + 1, :]
    tox = tgt[nc + 1:nc + 2, :]
    toy = tgt[nc + 2:nc + 3, :]
    tw = tgt[nc + 3:nc + 4, :]
    th = tgt[nc + 4:nc + 5, :]
    tgt_cls = tgt[:nc, :]                                    # (NC, L)
    L = tgt_conf.shape[-1]
    s_tw = jnp.sqrt(tw)
    s_th = jnp.sqrt(th)
    obj = (tgt_conf > 0.0).astype(f32)                       # (1, L)

    # Predictions, anchor-packed on sublanes, each (A, L).
    conf_logit = load_feat(nc)
    tx_logit = load_feat(nc + 1)
    ty_logit = load_feat(nc + 2)
    tw_logit = load_feat(nc + 3)
    th_logit = load_feat(nc + 4)

    pred_conf = jax.nn.sigmoid(conf_logit)
    px = jax.nn.sigmoid(tx_logit)            # grid offset cancels everywhere
    py = jax.nn.sigmoid(ty_logit)
    # pred_wh = exp(t) * anchor  =>  sqrt(pred_wh) = exp(0.5 t) * sqrt(anchor)
    s_aw = jnp.sqrt(anc[:, 0:1])                             # (A, 1)
    s_ah = jnp.sqrt(anc[:, 1:2])
    s_pw = jnp.exp(0.5 * tw_logit) * s_aw                    # (A, L)
    s_ph = jnp.exp(0.5 * th_logit) * s_ah
    pw = s_pw * s_pw
    ph = s_ph * s_ph

    # IoU(pred, target) per anchor (translation invariant -> no grid tensor).
    iw = jnp.maximum(jnp.minimum(px + 0.5 * pw, tox + 0.5 * tw)
                     - jnp.maximum(px - 0.5 * pw, tox - 0.5 * tw), 0.0)
    ih = jnp.maximum(jnp.minimum(py + 0.5 * ph, toy + 0.5 * th)
                     - jnp.maximum(py - 0.5 * ph, toy - 0.5 * th), 0.0)
    inter = iw * ih
    union = pw * ph + tw * th - inter
    iou = inter / jnp.maximum(union, 1e-10)                  # (A, L)

    # Responsible anchor: first arg-max of IoU over anchors.
    a_ids = jax.lax.broadcasted_iota(jnp.int32, (na, L), 0)
    max_iou = jnp.max(iou, axis=0, keepdims=True)
    best_a = jnp.min(jnp.where(iou >= max_iou, a_ids, na), axis=0, keepdims=True)
    resp = (a_ids == best_a).astype(f32)                     # (A, L)
    mask = resp * obj                                        # (A, L)

    # Box / objectness / no-object terms.
    dx = px - tox
    dy = py - toy
    dw = s_pw - s_tw
    dh = s_ph - s_th
    box_sq = dx * dx + dy * dy + dw * dw + dh * dh
    box_lane = jnp.sum(box_sq * mask, axis=0, keepdims=True)

    dconf = pred_conf - tgt_conf
    conf_lane = jnp.sum(dconf * dconf * mask, axis=0, keepdims=True)
    noobj_lane = jnp.sum(pred_conf * pred_conf * (1.0 - mask),
                         axis=0, keepdims=True)

    # Class CE only at the responsible anchor -> a single LSE per cell.
    sel = load_cls(0) * mask[0:1, :]                         # (NC, L)
    for a in range(1, na):
        sel = sel + load_cls(a) * mask[a:a + 1, :]
    c_ids = jax.lax.broadcasted_iota(jnp.int32, (nc, L), 0)
    max_c = jnp.max(tgt_cls, axis=0, keepdims=True)
    cls_id = jnp.min(jnp.where(tgt_cls >= max_c, c_ids, nc),
                     axis=0, keepdims=True)                  # first arg-max
    onehot = (c_ids == cls_id).astype(f32)                   # (NC, L)
    m = jnp.max(sel, axis=0, keepdims=True)
    lse = jnp.log(jnp.sum(jnp.exp(sel - m), axis=0, keepdims=True)) + m
    tgt_logit = jnp.sum(sel * onehot, axis=0, keepdims=True)
    cls_lane = (lse - tgt_logit) * obj                       # (1, L)

    return box_lane, conf_lane, noobj_lane, cls_lane


# ---------------------------------------------------------------------------
# Pallas kernel: grid = (batch, cell-tiles).  Per-lane partial sums live in a
# VMEM scratch; the cross-lane reduction happens once per image.
# ---------------------------------------------------------------------------
def yolo_loss_kernel(out_ref, tgt_ref, anc_ref, o_ref, acc_ref):
    t = pl.program_id(1)

    @pl.when(t == 0)
    def _init():
        acc_ref[...] = jnp.zeros_like(acc_ref)

    def load_feat(k):        # rows k, k+C, ..., one per anchor -> (A, L)
        return out_ref[pl.ds(k, A, stride=C), :]

    def load_cls(a):         # class logits of anchor a -> (NUM_CLASSES, L)
        return out_ref[a * C:a * C + NUM_CLASSES, :]

    box_l, conf_l, noobj_l, cls_l = _loss_lane_sums(
        load_feat, load_cls, tgt_ref, anc_ref)

    acc_ref[0:1, :] += box_l
    acc_ref[1:2, :] += conf_l
    acc_ref[2:3, :] += noobj_l
    acc_ref[3:4, :] += cls_l

    @pl.when(t == pl.num_programs(1) - 1)
    def _finalize():
        # One cross-lane reduction + tiny store per image (not per tile).
        o_ref[...] = jnp.sum(acc_ref[...], axis=1, keepdims=True)


def _pick_tile_hw(hw, max_tile=1024):
    # Lane-dim rule: the block's last dim must be a multiple of 128 or the
    # full dimension.  Bigger tiles amortise the ~0.35us/step pipeline
    # overhead; max_tile keeps vreg pressure / spilling moderate.
    if hw % 128 != 0 or hw <= max_tile:
        return hw
    t = (max_tile // 128) * 128
    while t > 128 and hw % t != 0:
        t -= 128
    return t


def yolo_loss_pallas(out_b2d, target_bcn, anchors, bsize, *, tile_hw=None):
    B, ac, HW = out_b2d.shape
    assert ac == A * C and target_bcn.shape == (B, C, HW)
    if tile_hw is None:
        tile_hw = _pick_tile_hw(HW)
    assert HW % tile_hw == 0
    num_tiles = HW // tile_hw

    partials = pl.pallas_call(
        yolo_loss_kernel,
        out_shape=jax.ShapeDtypeStruct((B, 4, 1), jnp.float32),
        grid_spec=pltpu.PrefetchScalarGridSpec(
            num_scalar_prefetch=0,
            grid=(B, num_tiles),
            in_specs=[
                pl.BlockSpec((None, A * C, tile_hw), lambda b, t: (b, 0, t)),
                pl.BlockSpec((None, C, tile_hw), lambda b, t: (b, 0, t)),
                pl.BlockSpec((A, 2), lambda b, t: (0, 0)),
            ],
            out_specs=pl.BlockSpec((None, 4, 1), lambda b, t: (b, 0, 0)),
            scratch_shapes=[pltpu.VMEM((4, tile_hw), jnp.float32)],
        ),
        compiler_params=pltpu.CompilerParams(
            # Batch axis can be sharded across TensorCores (v7x megacore);
            # the cell-tile axis is a sequential reduction.
            dimension_semantics=("parallel", "arbitrary")),
    )(out_b2d, target_bcn, anchors)

    sums = jnp.sum(partials[:, :, 0], axis=0)                # (4,)
    return ((LAMBDA_COORD / bsize) * sums[0],
            (LAMBDA_OBJ / bsize) * sums[1],
            (LAMBDA_NOOBJ / bsize) * sums[2],
            (LAMBDA_CLS / bsize) * sums[3])


# ---------------------------------------------------------------------------
# Host-side glue (matches the PyTorch build_target helper).
# ---------------------------------------------------------------------------
def build_target_np(gt_boxes, gt_classes, num_box, bsize, H, W, num_classes):
    # TODO(synk): data-dependent scatter loop kept on host (matches torch build_target).
    target = np.zeros((bsize, H, W, num_classes + 5), np.float32)
    for b in range(bsize):
        for o in range(int(num_box[b])):
            bbox = gt_boxes[b, o]
            cls = int(gt_classes[b, o])
            scale = 1.0 / H
            gx_i = int(bbox[0] // scale)
            gy_i = int(bbox[1] // scale)
            x_off = bbox[0] / scale - gx_i
            y_off = bbox[1] / scale - gy_i
            w = bbox[2] / scale
            h = bbox[3] / scale
            target[b, gy_i, gx_i, num_classes:num_classes + 5] = [1.0, x_off, y_off, w, h]
            target[b, gy_i, gx_i, cls] = 1.0
    # Channel-major, lane-dense layout: (B, C, H*W).
    return np.ascontiguousarray(
        target.reshape(bsize, H * W, num_classes + 5).transpose(0, 2, 1))


def yolo_loss(out_nchw, gt_boxes, gt_classes, num_box, *, tile_hw=None):
    B, cout, H, W = out_nchw.shape
    assert cout == A * C
    HW = H * W
    # Free reshape (channel dim is anchor-major, feature-minor): grid cells
    # land on the lane axis with no transpose / extra HBM pass.
    out_b2d = out_nchw.reshape(B, A * C, HW).astype(jnp.float32)
    target_bcn = jnp.asarray(build_target_np(
        np.asarray(gt_boxes), np.asarray(gt_classes), np.asarray(num_box),
        B, H, W, NUM_CLASSES))
    anchors = jnp.asarray(np.asarray(ANCHOR_BOX, dtype=np.float32))

    losses = yolo_loss_pallas(out_b2d, target_bcn, anchors, B, tile_hw=tile_hw)
    return losses, (out_b2d, target_bcn, anchors)


# ---------------------------------------------------------------------------
# Pure-JAX reference (same math, whole image at once).
# ---------------------------------------------------------------------------
def _ref_one_image(out2d, tgt, anc):
    parts = _loss_lane_sums(
        lambda k: out2d[k::C, :],
        lambda a: out2d[a * C:a * C + NUM_CLASSES, :],
        tgt, anc)
    return jnp.concatenate(parts, axis=0)                    # (4, HW)


def yolo_loss_ref(out_b2d, target_bcn, anchors, bsize):
    per_b = jax.vmap(_ref_one_image, in_axes=(0, 0, None))(
        out_b2d, target_bcn, anchors)                        # (B, 4, HW)
    sums = jnp.sum(per_b, axis=(0, 2))
    return ((LAMBDA_COORD / bsize) * sums[0],
            (LAMBDA_OBJ / bsize) * sums[1],
            (LAMBDA_NOOBJ / bsize) * sums[2],
            (LAMBDA_CLS / bsize) * sums[3])


# ---------------------------------------------------------------------------
if __name__ == "__main__":
    key = jax.random.PRNGKey(0)
    k1, k2, k3, k4 = jax.random.split(key, 4)

    B, H, W = 2, 8, 8
    max_obj = 4

    out = 0.5 * jax.random.normal(k1, (B, A * C, H, W), jnp.float32)
    gt_xy = jax.random.uniform(k2, (B, max_obj, 2), minval=0.05, maxval=0.95)
    gt_wh = jax.random.uniform(k3, (B, max_obj, 2), minval=0.05, maxval=0.40)
    gt_boxes = jnp.concatenate([gt_xy, gt_wh], axis=-1)       # (B, max_obj, 4)
    gt_classes = jax.random.randint(k4, (B, max_obj), 0, NUM_CLASSES)
    num_box = jnp.array([3, 4], dtype=jnp.int32)

    losses, ref_inputs = yolo_loss(out, gt_boxes, gt_classes, num_box)
    losses = jax.block_until_ready(losses)

    ref = yolo_loss_ref(*ref_inputs, B)
    for got, want in zip(losses, ref):
        got_f, want_f = float(got), float(want)
        assert abs(got_f - want_f) <= 1e-3 * max(1.0, abs(want_f)), (got_f, want_f)

    print("KERNEL_OK")
</pallas_src>

<mosaic_0001>
module attributes {stable_mosaic.version = 11 : i64} {
  func.func @yolo_loss_kernel(%arg0: i32, %arg1: i32, %arg2: memref<1x125x64xf32, #tpu.memory_space<vmem>>, %arg3: memref<1x25x64xf32, #tpu.memory_space<vmem>>, %arg4: memref<5x2xf32, #tpu.memory_space<vmem>>, %arg5: memref<1x4x1xf32, #tpu.memory_space<vmem>>, %arg6: memref<4x64xf32, #tpu.memory_space<vmem>>) attributes {dimension_semantics = [#tpu.dimension_semantics<parallel>, #tpu.dimension_semantics<arbitrary>], iteration_bounds = array<i64: 2, 1>, scalar_prefetch = 0 : i64, scratch_operands = 1 : i64, tpu.core_type = #tpu.core_type<tc>, window_params = [{transform_indices = @transform_0, window_bounds = array<i64: 1, 125, 64>}, {transform_indices = @transform_1, window_bounds = array<i64: 1, 25, 64>}, {pipeline_mode = #tpu.pipeline_mode<synchronous>, transform_indices = @transform_2, window_bounds = array<i64: 5, 2>}, {transform_indices = @transform_3, window_bounds = array<i64: 1, 4, 1>}]} {
    %c0_i32 = arith.constant 0 : i32
    %0 = arith.cmpi eq, %arg1, %c0_i32 : i32
    %1 = arith.extui %0 : i1 to i32
    %c0_i32_0 = arith.constant 0 : i32
    %2 = arith.cmpi ne, %1, %c0_i32_0 : i32
    scf.if %2 {
      %cst_85 = arith.constant 0.000000e+00 : f32
      %225 = vector.broadcast %cst_85 : f32 to vector<4x64xf32>
      %c0_86 = arith.constant 0 : index
      %c0_87 = arith.constant 0 : index
      %226 = vector.load %arg6[%c0_86, %c0_87] : memref<4x64xf32, #tpu.memory_space<vmem>>, vector<4x64xf32>
      tpu.vector_store %arg6[%c0_86, %c0_87], %225 {strides = array<i32>} : memref<4x64xf32, #tpu.memory_space<vmem>>, vector<4x64xf32>,
    } else {
    }
    %c0 = arith.constant 0 : index
    %c20 = arith.constant 20 : index
    %c0_1 = arith.constant 0 : index
    %3 = vector.load %arg3[%c0, %c20, %c0_1] : memref<1x25x64xf32, #tpu.memory_space<vmem>>, vector<1x1x64xf32>
    %4 = vector.shape_cast %3 : vector<1x1x64xf32> to vector<1x64xf32>
    %c0_2 = arith.constant 0 : index
    %c21 = arith.constant 21 : index
    %c0_3 = arith.constant 0 : index
    %5 = vector.load %arg3[%c0_2, %c21, %c0_3] : memref<1x25x64xf32, #tpu.memory_space<vmem>>, vector<1x1x64xf32>
    %6 = vector.shape_cast %5 : vector<1x1x64xf32> to vector<1x64xf32>
    %c0_4 = arith.constant 0 : index
    %c22 = arith.constant 22 : index
    %c0_5 = arith.constant 0 : index
    %7 = vector.load %arg3[%c0_4, %c22, %c0_5] : memref<1x25x64xf32, #tpu.memory_space<vmem>>, vector<1x1x64xf32>
    %8 = vector.shape_cast %7 : vector<1x1x64xf32> to vector<1x64xf32>
    %c0_6 = arith.constant 0 : index
    %c23 = arith.constant 23 : index
    %c0_7 = arith.constant 0 : index
    %9 = vector.load %arg3[%c0_6, %c23, %c0_7] : memref<1x25x64xf32, #tpu.memory_space<vmem>>, vector<1x1x64xf32>
    %10 = vector.shape_cast %9 : vector<1x1x64xf32> to vector<1x64xf32>
    %c0_8 = arith.constant 0 : index
    %c24 = arith.constant 24 : index
    %c0_9 = arith.constant 0 : index
    %11 = vector.load %arg3[%c0_8, %c24, %c0_9] : memref<1x25x64xf32, #tpu.memory_space<vmem>>, vector<1x1x64xf32>
    %12 = vector.shape_cast %11 : vector<1x1x64xf32> to vector<1x64xf32>
    %c0_10 = arith.constant 0 : index
    %c0_11 = arith.constant 0 : index
    %c0_12 = arith.constant 0 : index
    %13 = vector.load %arg3[%c0_10, %c0_11, %c0_12] : memref<1x25x64xf32, #tpu.memory_space<vmem>>, vector<1x20x64xf32>
    %14 = vector.shape_cast %13 : vector<1x20x64xf32> to vector<20x64xf32>
    %15 = math.sqrt %10 : vector<1x64xf32>
    %16 = math.sqrt %12 : vector<1x64xf32>
    %cst = arith.constant 0.000000e+00 : f32
    %17 = vector.broadcast %cst : f32 to vector<1x64xf32>
    %18 = arith.cmpf ogt, %4, %17 : vector<1x64xf32>
    %19 = arith.extui %18 : vector<1x64xi1> to vector<1x64xi32>
    %20 = arith.sitofp %19 : vector<1x64xi32> to vector<1x64xf32>
    %c0_13 = arith.constant 0 : index
    %c20_14 = arith.constant 20 : index
    %c0_15 = arith.constant 0 : index
    %21 = tpu.strided_load %arg2[%c0_13, %c20_14, %c0_15] {strides = array<i32: 1, 25, 1>} : memref<1x125x64xf32, #tpu.memory_space<vmem>>, vector<1x5x64xf32>
    %22 = vector.shape_cast %21 : vector<1x5x64xf32> to vector<5x64xf32>
    %c0_16 = arith.constant 0 : index
    %c21_17 = arith.constant 21 : index
    %c0_18 = arith.constant 0 : index
    %23 = tpu.strided_load %arg2[%c0_16, %c21_17, %c0_18] {strides = array<i32: 1, 25, 1>} : memref<1x125x64xf32, #tpu.memory_space<vmem>>, vector<1x5x64xf32>
    %24 = vector.shape_cast %23 : vector<1x5x64xf32> to vector<5x64xf32>
    %c0_19 = arith.constant 0 : index
    %c22_20 = arith.constant 22 : index
    %c0_21 = arith.constant 0 : index
    %25 = tpu.strided_load %arg2[%c0_19, %c22_20, %c0_21] {strides = array<i32: 1, 25, 1>} : memref<1x125x64xf32, #tpu.memory_space<vmem>>, vector<1x5x64xf32>
    %26 = vector.shape_cast %25 : vector<1x5x64xf32> to vector<5x64xf32>
    %c0_22 = arith.constant 0 : index
    %c23_23 = arith.constant 23 : index
    %c0_24 = arith.constant 0 : index
    %27 = tpu.strided_load %arg2[%c0_22, %c23_23, %c0_24] {strides = array<i32: 1, 25, 1>} : memref<1x125x64xf32, #tpu.memory_space<vmem>>, vector<1x5x64xf32>
    %28 = vector.shape_cast %27 : vector<1x5x64xf32> to vector<5x64xf32>
    %c0_25 = arith.constant 0 : index
    %c24_26 = arith.constant 24 : index
    %c0_27 = arith.constant 0 : index
    %29 = tpu.strided_load %arg2[%c0_25, %c24_26, %c0_27] {strides = array<i32: 1, 25, 1>} : memref<1x125x64xf32, #tpu.memory_space<vmem>>, vector<1x5x64xf32>
    %30 = vector.shape_cast %29 : vector<1x5x64xf32> to vector<5x64xf32>
    %31 = arith.negf %22 : vector<5x64xf32>
    %32 = math.exp %31 : vector<5x64xf32>
    %cst_28 = arith.constant 1.000000e+00 : f32
    %33 = vector.broadcast %cst_28 : f32 to vector<5x64xf32>
    %34 = arith.addf %33, %32 : vector<5x64xf32>
    %35 = arith.divf %33, %34 : vector<5x64xf32>
    %36 = arith.negf %24 : vector<5x64xf32>
    %37 = math.exp %36 : vector<5x64xf32>
    %cst_29 = arith.constant 1.000000e+00 : f32
    %38 = vector.broadcast %cst_29 : f32 to vector<5x64xf32>
    %39 = arith.addf %38, %37 : vector<5x64xf32>
    %40 = arith.divf %38, %39 : vector<5x64xf32>
    %41 = arith.negf %26 : vector<5x64xf32>
    %42 = math.exp %41 : vector<5x64xf32>
    %cst_30 = arith.constant 1.000000e+00 : f32
    %43 = vector.broadcast %cst_30 : f32 to vector<5x64xf32>
    %44 = arith.addf %43, %42 : vector<5x64xf32>
    %45 = arith.divf %43, %44 : vector<5x64xf32>
    %c0_31 = arith.constant 0 : index
    %c0_32 = arith.constant 0 : index
    %46 = vector.load %arg4[%c0_31, %c0_32] : memref<5x2xf32, #tpu.memory_space<vmem>>, vector<5x1xf32>
    %47 = math.sqrt %46 : vector<5x1xf32>
    %c0_33 = arith.constant 0 : index
    %c1 = arith.constant 1 : index
    %48 = vector.load %arg4[%c0_33, %c1] : memref<5x2xf32, #tpu.memory_space<vmem>>, vector<5x1xf32>
    %49 = math.sqrt %48 : vector<5x1xf32>
    %cst_34 = arith.constant 5.000000e-01 : f32
    %50 = vector.broadcast %cst_34 : f32 to vector<5x64xf32>
    %51 = arith.mulf %50, %28 : vector<5x64xf32>
    %52 = math.exp %51 : vector<5x64xf32>
    %53 = vector.broadcast %47 : vector<5x1xf32> to vector<5x64xf32>
    %54 = arith.mulf %52, %53 : vector<5x64xf32>
    %cst_35 = arith.constant 5.000000e-01 : f32
    %55 = vector.broadcast %cst_35 : f32 to vector<5x64xf32>
    %56 = arith.mulf %55, %30 : vector<5x64xf32>
    %57 = math.exp %56 : vector<5x64xf32>
    %58 = vector.broadcast %49 : vector<5x1xf32> to vector<5x64xf32>
    %59 = arith.mulf %57, %58 : vector<5x64xf32>
    %60 = arith.mulf %54, %54 : vector<5x64xf32>
    %61 = arith.mulf %59, %59 : vector<5x64xf32>
    %cst_36 = arith.constant 5.000000e-01 : f32
    %62 = vector.broadcast %cst_36 : f32 to vector<5x64xf32>
    %63 = arith.mulf %62, %60 : vector<5x64xf32>
    %64 = arith.addf %40, %63 : vector<5x64xf32>
    %cst_37 = arith.constant 5.000000e-01 : f32
    %65 = vector.broadcast %cst_37 : f32 to vector<1x64xf32>
    %66 = arith.mulf %65, %10 : vector<1x64xf32>
    %67 = arith.addf %6, %66 : vector<1x64xf32>
    %68 = vector.broadcast %67 : vector<1x64xf32> to vector<5x64xf32>
    %69 = arith.minimumf %64, %68 : vector<5x64xf32>
    %cst_38 = arith.constant 5.000000e-01 : f32
    %70 = vector.broadcast %cst_38 : f32 to vector<5x64xf32>
    %71 = arith.mulf %70, %60 : vector<5x64xf32>
    %72 = arith.subf %40, %71 : vector<5x64xf32>
    %cst_39 = arith.constant 5.000000e-01 : f32
    %73 = vector.broadcast %cst_39 : f32 to vector<1x64xf32>
    %74 = arith.mulf %73, %10 : vector<1x64xf32>
    %75 = arith.subf %6, %74 : vector<1x64xf32>
    %76 = vector.broadcast %75 : vector<1x64xf32> to vector<5x64xf32>
    %77 = arith.maximumf %72, %76 : vector<5x64xf32>
    %78 = arith.subf %69, %77 : vector<5x64xf32>
    %cst_40 = arith.constant 0.000000e+00 : f32
    %79 = vector.broadcast %cst_40 : f32 to vector<5x64xf32>
    %80 = arith.maximumf %78, %79 : vector<5x64xf32>
    %cst_41 = arith.constant 5.000000e-01 : f32
    %81 = vector.broadcast %cst_41 : f32 to vector<5x64xf32>
    %82 = arith.mulf %81, %61 : vector<5x64xf32>
    %83 = arith.addf %45, %82 : vector<5x64xf32>
    %cst_42 = arith.constant 5.000000e-01 : f32
    %84 = vector.broadcast %cst_42 : f32 to vector<1x64xf32>
    %85 = arith.mulf %84, %12 : vector<1x64xf32>
    %86 = arith.addf %8, %85 : vector<1x64xf32>
    %87 = vector.broadcast %86 : vector<1x64xf32> to vector<5x64xf32>
    %88 = arith.minimumf %83, %87 : vector<5x64xf32>
    %cst_43 = arith.constant 5.000000e-01 : f32
    %89 = vector.broadcast %cst_43 : f32 to vector<5x64xf32>
    %90 = arith.mulf %89, %61 : vector<5x64xf32>
    %91 = arith.subf %45, %90 : vector<5x64xf32>
    %cst_44 = arith.constant 5.000000e-01 : f32
    %92 = vector.broadcast %cst_44 : f32 to vector<1x64xf32>
    %93 = arith.mulf %92, %12 : vector<1x64xf32>
    %94 = arith.subf %8, %93 : vector<1x64xf32>
    %95 = vector.broadcast %94 : vector<1x64xf32> to vector<5x64xf32>
    %96 = arith.maximumf %91, %95 : vector<5x64xf32>
    %97 = arith.subf %88, %96 : vector<5x64xf32>
    %cst_45 = arith.constant 0.000000e+00 : f32
    %98 = vector.broadcast %cst_45 : f32 to vector<5x64xf32>
    %99 = arith.maximumf %97, %98 : vector<5x64xf32>
    %100 = arith.mulf %80, %99 : vector<5x64xf32>
    %101 = arith.mulf %60, %61 : vector<5x64xf32>
    %102 = arith.mulf %10, %12 : vector<1x64xf32>
    %103 = vector.broadcast %102 : vector<1x64xf32> to vector<5x64xf32>
    %104 = arith.addf %101, %103 : vector<5x64xf32>
    %105 = arith.subf %104, %100 : vector<5x64xf32>
    %cst_46 = arith.constant 1.000000e-10 : f32
    %106 = vector.broadcast %cst_46 : f32 to vector<5x64xf32>
    %107 = arith.maximumf %105, %106 : vector<5x64xf32>
    %108 = arith.divf %100, %107 : vector<5x64xf32>
    %109 = tpu.iota {dimensions = array<i32: 0>} : vector<5x64xi32>
    %cst_47 = arith.constant dense<0xFF800000> : vector<64xf32>
    %110 = vector.multi_reduction <maximumf>, %108, %cst_47 [0] : vector<5x64xf32> to vector<64xf32>
    %111 = vector.shape_cast %110 : vector<64xf32> to vector<1x64xf32>
    %112 = vector.broadcast %111 : vector<1x64xf32> to vector<5x64xf32>
    %113 = arith.cmpf oge, %108, %112 : vector<5x64xf32>
    %c5_i32 = arith.constant 5 : i32
    %114 = vector.broadcast %c5_i32 : i32 to vector<5x64xi32>
    %115 = arith.select %113, %109, %114 : vector<5x64xi1>, vector<5x64xi32>
    %cst_48 = arith.constant dense<2147483647> : vector<64xi32>
    %116 = vector.multi_reduction <minsi>, %115, %cst_48 [0] : vector<5x64xi32> to vector<64xi32>
    %117 = vector.shape_cast %116 : vector<64xi32> to vector<1x64xi32>
    %118 = vector.broadcast %117 : vector<1x64xi32> to vector<5x64xi32>
    %119 = arith.cmpi eq, %109, %118 : vector<5x64xi32>
    %120 = arith.extui %119 : vector<5x64xi1> to vector<5x64xi32>
    %121 = arith.sitofp %120 : vector<5x64xi32> to vector<5x64xf32>
    %122 = vector.broadcast %20 : vector<1x64xf32> to vector<5x64xf32>
    %123 = arith.mulf %121, %122 : vector<5x64xf32>
    %124 = vector.broadcast %6 : vector<1x64xf32> to vector<5x64xf32>
    %125 = arith.subf %40, %124 : vector<5x64xf32>
    %126 = vector.broadcast %8 : vector<1x64xf32> to vector<5x64xf32>
    %127 = arith.subf %45, %126 : vector<5x64xf32>
    %128 = vector.broadcast %15 : vector<1x64xf32> to vector<5x64xf32>
    %129 = arith.subf %54, %128 : vector<5x64xf32>
    %130 = vector.broadcast %16 : vector<1x64xf32> to vector<5x64xf32>
    %131 = arith.subf %59, %130 : vector<5x64xf32>
    %132 = arith.mulf %125, %125 : vector<5x64xf32>
    %133 = arith.mulf %127, %127 : vector<5x64xf32>
    %134 = arith.addf %132, %133 : vector<5x64xf32>
    %135 = arith.mulf %129, %129 : vector<5x64xf32>
    %136 = arith.addf %134, %135 : vector<5x64xf32>
    %137 = arith.mulf %131, %131 : vector<5x64xf32>
    %138 = arith.addf %136, %137 : vector<5x64xf32>
    %139 = arith.mulf %138, %123 : vector<5x64xf32>
    %cst_49 = arith.constant dense<0.000000e+00> : vector<64xf32>
    %140 = vector.multi_reduction <add>, %139, %cst_49 [0] : vector<5x64xf32> to vector<64xf32>
    %141 = vector.shape_cast %140 : vector<64xf32> to vector<1x64xf32>
    %142 = vector.broadcast %4 : vector<1x64xf32> to vector<5x64xf32>
    %143 = arith.subf %35, %142 : vector<5x64xf32>
    %144 = arith.mulf %143, %143 : vector<5x64xf32>
    %145 = arith.mulf %144, %123 : vector<5x64xf32>
    %cst_50 = arith.constant dense<0.000000e+00> : vector<64xf32>
    %146 = vector.multi_reduction <add>, %145, %cst_50 [0] : vector<5x64xf32> to vector<64xf32>
    %147 = vector.shape_cast %146 : vector<64xf32> to vector<1x64xf32>
    %148 = arith.mulf %35, %35 : vector<5x64xf32>
    %cst_51 = arith.constant 1.000000e+00 : f32
    %149 = vector.broadcast %cst_51 : f32 to vector<5x64xf32>
    %150 = arith.subf %149, %123 : vector<5x64xf32>
    %151 = arith.mulf %148, %150 : vector<5x64xf32>
    %cst_52 = arith.constant dense<0.000000e+00> : vector<64xf32>
    %152 = vector.multi_reduction <add>, %151, %cst_52 [0] : vector<5x64xf32> to vector<64xf32>
    %153 = vector.shape_cast %152 : vector<64xf32> to vector<1x64xf32>
    %c0_53 = arith.constant 0 : index
    %c0_54 = arith.constant 0 : index
    %c0_55 = arith.constant 0 : index
    %154 = vector.load %arg2[%c0_53, %c0_54, %c0_55] : memref<1x125x64xf32, #tpu.memory_space<vmem>>, vector<1x20x64xf32>
    %155 = vector.shape_cast %154 : vector<1x20x64xf32> to vector<20x64xf32>
    %156 = vector.extract_strided_slice %123 {offsets = [0, 0], sizes = [1, 64], strides = [1, 1]} : vector<5x64xf32> to vector<1x64xf32>
    %157 = vector.broadcast %156 : vector<1x64xf32> to vector<20x64xf32>
    %158 = arith.mulf %155, %157 : vector<20x64xf32>
    %c0_56 = arith.constant 0 : index
    %c25 = arith.constant 25 : index
    %c0_57 = arith.constant 0 : index
    %159 = vector.load %arg2[%c0_56, %c25, %c0_57] : memref<1x125x64xf32, #tpu.memory_space<vmem>>, vector<1x20x64xf32>
    %160 = vector.shape_cast %159 : vector<1x20x64xf32> to vector<20x64xf32>
    %161 = vector.extract_strided_slice %123 {offsets = [1, 0], sizes = [1, 64], strides = [1, 1]} : vector<5x64xf32> to vector<1x64xf32>
    %162 = vector.broadcast %161 : vector<1x64xf32> to vector<20x64xf32>
    %163 = arith.mulf %160, %162 : vector<20x64xf32>
    %164 = arith.addf %158, %163 : vector<20x64xf32>
    %c0_58 = arith.constant 0 : index
    %c50 = arith.constant 50 : index
    %c0_59 = arith.constant 0 : index
    %165 = vector.load %arg2[%c0_58, %c50, %c0_59] : memref<1x125x64xf32, #tpu.memory_space<vmem>>, vector<1x20x64xf32>
    %166 = vector.shape_cast %165 : vector<1x20x64xf32> to vector<20x64xf32>
    %167 = vector.extract_strided_slice %123 {offsets = [2, 0], sizes = [1, 64], strides = [1, 1]} : vector<5x64xf32> to vector<1x64xf32>
    %168 = vector.broadcast %167 : vector<1x64xf32> to vector<20x64xf32>
    %169 = arith.mulf %166, %168 : vector<20x64xf32>
    %170 = arith.addf %164, %169 : vector<20x64xf32>
    %c0_60 = arith.constant 0 : index
    %c75 = arith.constant 75 : index
    %c0_61 = arith.constant 0 : index
    %171 = vector.load %arg2[%c0_60, %c75, %c0_61] : memref<1x125x64xf32, #tpu.memory_space<vmem>>, vector<1x20x64xf32>
    %172 = vector.shape_cast %171 : vector<1x20x64xf32> to vector<20x64xf32>
    %173 = vector.extract_strided_slice %123 {offsets = [3, 0], sizes = [1, 64], strides = [1, 1]} : vector<5x64xf32> to vector<1x64xf32>
    %174 = vector.broadcast %173 : vector<1x64xf32> to vector<20x64xf32>
    %175 = arith.mulf %172, %174 : vector<20x64xf32>
    %176 = arith.addf %170, %175 : vector<20x64xf32>
    %c0_62 = arith.constant 0 : index
    %c100 = arith.constant 100 : index
    %c0_63 = arith.constant 0 : index
    %177 = vector.load %arg2[%c0_62, %c100, %c0_63] : memref<1x125x64xf32, #tpu.memory_space<vmem>>, vector<1x20x64xf32>
    %178 = vector.shape_cast %177 : vector<1x20x64xf32> to vector<20x64xf32>
    %179 = vector.extract_strided_slice %123 {offsets = [4, 0], sizes = [1, 64], strides = [1, 1]} : vector<5x64xf32> to vector<1x64xf32>
    %180 = vector.broadcast %179 : vector<1x64xf32> to vector<20x64xf32>
    %181 = arith.mulf %178, %180 : vector<20x64xf32>
    %182 = arith.addf %176, %181 : vector<20x64xf32>
    %183 = tpu.iota {dimensions = array<i32: 0>} : vector<20x64xi32>
    %cst_64 = arith.constant dense<0xFF800000> : vector<64xf32>
    %184 = vector.multi_reduction <maximumf>, %14, %cst_64 [0] : vector<20x64xf32> to vector<64xf32>
    %185 = vector.shape_cast %184 : vector<64xf32> to vector<1x64xf32>
    %186 = vector.broadcast %185 : vector<1x64xf32> to vector<20x64xf32>
    %187 = arith.cmpf oge, %14, %186 : vector<20x64xf32>
    %c20_i32 = arith.constant 20 : i32
    %188 = vector.broadcast %c20_i32 : i32 to vector<20x64xi32>
    %189 = arith.select %187, %183, %188 : vector<20x64xi1>, vector<20x64xi32>
    %cst_65 = arith.constant dense<2147483647> : vector<64xi32>
    %190 = vector.multi_reduction <minsi>, %189, %cst_65 [0] : vector<20x64xi32> to vector<64xi32>
    %191 = vector.shape_cast %190 : vector<64xi32> to vector<1x64xi32>
    %192 = vector.broadcast %191 : vector<1x64xi32> to vector<20x64xi32>
    %193 = arith.cmpi eq, %183, %192 : vector<20x64xi32>
    %194 = arith.extui %193 : vector<20x64xi1> to vector<20x64xi32>
    %195 = arith.sitofp %194 : vector<20x64xi32> to vector<20x64xf32>
    %cst_66 = arith.constant dense<0xFF800000> : vector<64xf32>
    %196 = vector.multi_reduction <maximumf>, %182, %cst_66 [0] : vector<20x64xf32> to vector<64xf32>
    %197 = vector.shape_cast %196 : vector<64xf32> to vector<1x64xf32>
    %198 = vector.broadcast %197 : vector<1x64xf32> to vector<20x64xf32>
    %199 = arith.subf %182, %198 : vector<20x64xf32>
    %200 = math.exp %199 : vector<20x64xf32>
    %cst_67 = arith.constant dense<0.000000e+00> : vector<64xf32>
    %201 = vector.multi_reduction <add>, %200, %cst_67 [0] : vector<20x64xf32> to vector<64xf32>
    %202 = vector.shape_cast %201 : vector<64xf32> to vector<1x64xf32>
    %203 = math.log %202 : vector<1x64xf32>
    %204 = arith.addf %203, %197 : vector<1x64xf32>
    %205 = arith.mulf %182, %195 : vector<20x64xf32>
    %cst_68 = arith.constant dense<0.000000e+00> : vector<64xf32>
    %206 = vector.multi_reduction <add>, %205, %cst_68 [0] : vector<20x64xf32> to vector<64xf32>
    %207 = vector.shape_cast %206 : vector<64xf32> to vector<1x64xf32>
    %208 = arith.subf %204, %207 : vector<1x64xf32>
    %209 = arith.mulf %208, %20 : vector<1x64xf32>
    %c0_69 = arith.constant 0 : index
    %c0_70 = arith.constant 0 : index
    %210 = vector.load %arg6[%c0_69, %c0_70] : memref<4x64xf32, #tpu.memory_space<vmem>>, vector<1x64xf32>
    %211 = arith.addf %210, %141 : vector<1x64xf32>
    %c0_71 = arith.constant 0 : index
    %c0_72 = arith.constant 0 : index
    %212 = vector.load %arg6[%c0_71, %c0_72] : memref<4x64xf32, #tpu.memory_space<vmem>>, vector<1x64xf32>
    tpu.vector_store %arg6[%c0_71, %c0_72], %211 {strides = array<i32>} : memref<4x64xf32, #tpu.memory_space<vmem>>, vector<1x64xf32>,
    %c1_73 = arith.constant 1 : index
    %c0_74 = arith.constant 0 : index
    %213 = vector.load %arg6[%c1_73, %c0_74] : memref<4x64xf32, #tpu.memory_space<vmem>>, vector<1x64xf32>
    %214 = arith.addf %213, %147 : vector<1x64xf32>
    %c1_75 = arith.constant 1 : index
    %c0_76 = arith.constant 0 : index
    %215 = vector.load %arg6[%c1_75, %c0_76] : memref<4x64xf32, #tpu.memory_space<vmem>>, vector<1x64xf32>
    tpu.vector_store %arg6[%c1_75, %c0_76], %214 {strides = array<i32>} : memref<4x64xf32, #tpu.memory_space<vmem>>, vector<1x64xf32>,
    %c2 = arith.constant 2 : index
    %c0_77 = arith.constant 0 : index
    %216 = vector.load %arg6[%c2, %c0_77] : memref<4x64xf32, #tpu.memory_space<vmem>>, vector<1x64xf32>
    %217 = arith.addf %216, %153 : vector<1x64xf32>
    %c2_78 = arith.constant 2 : index
    %c0_79 = arith.constant 0 : index
    %218 = vector.load %arg6[%c2_78, %c0_79] : memref<4x64xf32, #tpu.memory_space<vmem>>, vector<1x64xf32>
    tpu.vector_store %arg6[%c2_78, %c0_79], %217 {strides = array<i32>} : memref<4x64xf32, #tpu.memory_space<vmem>>, vector<1x64xf32>,
    %c3 = arith.constant 3 : index
    %c0_80 = arith.constant 0 : index
    %219 = vector.load %arg6[%c3, %c0_80] : memref<4x64xf32, #tpu.memory_space<vmem>>, vector<1x64xf32>
    %220 = arith.addf %219, %209 : vector<1x64xf32>
    %c3_81 = arith.constant 3 : index
    %c0_82 = arith.constant 0 : index
    %221 = vector.load %arg6[%c3_81, %c0_82] : memref<4x64xf32, #tpu.memory_space<vmem>>, vector<1x64xf32>
    tpu.vector_store %arg6[%c3_81, %c0_82], %220 {strides = array<i32>} : memref<4x64xf32, #tpu.memory_space<vmem>>, vector<1x64xf32>,
    %c0_i32_83 = arith.constant 0 : i32
    %222 = arith.cmpi eq, %arg1, %c0_i32_83 : i32
    %223 = arith.extui %222 : i1 to i32
    %c0_i32_84 = arith.constant 0 : i32
    %224 = arith.cmpi ne, %223, %c0_i32_84 : i32
    scf.if %224 {
      %c0_85 = arith.constant 0 : index
      %c0_86 = arith.constant 0 : index
      %225 = vector.load %arg6[%c0_85, %c0_86] : memref<4x64xf32, #tpu.memory_space<vmem>>, vector<4x64xf32>
      %cst_87 = arith.constant dense<0.000000e+00> : vector<4xf32>
      %226 = vector.multi_reduction <add>, %225, %cst_87 [1] : vector<4x64xf32> to vector<4xf32>
      %227 = vector.shape_cast %226 : vector<4xf32> to vector<4x1xf32>
      %c0_88 = arith.constant 0 : index
      %c0_89 = arith.constant 0 : index
      %c0_90 = arith.constant 0 : index
      %228 = vector.load %arg5[%c0_88, %c0_89, %c0_90] : memref<1x4x1xf32, #tpu.memory_space<vmem>>, vector<1x4x1xf32>
      %229 = vector.shape_cast %228 : vector<1x4x1xf32> to vector<4x1xf32>
      %230 = vector.shape_cast %227 : vector<4x1xf32> to vector<1x4x1xf32>
      tpu.vector_store %arg5[%c0_88, %c0_89, %c0_90], %230 {strides = array<i32>} : memref<1x4x1xf32, #tpu.memory_space<vmem>>, vector<1x4x1xf32>,
    } else {
    }
    return
  }
  func.func @transform_0(%arg0: i32, %arg1: i32) -> (i32, i32, i32) {
    %c0_i32 = arith.constant 0 : i32
    %c0_i32_0 = arith.constant 0 : i32
    return %arg0, %c0_i32, %arg1 : i32, i32, i32
  }
  func.func @transform_1(%arg0: i32, %arg1: i32) -> (i32, i32, i32) {
    %c0_i32 = arith.constant 0 : i32
    %c0_i32_0 = arith.constant 0 : i32
    return %arg0, %c0_i32, %arg1 : i32, i32, i32
  }
  func.func @transform_2(%arg0: i32, %arg1: i32) -> (i32, i32) {
    %c0_i32 = arith.constant 0 : i32
    %c0_i32_0 = arith.constant 0 : i32
    %c0_i32_1 = arith.constant 0 : i32
    return %c0_i32, %c0_i32_0 : i32, i32
  }
  func.func @transform_3(%arg0: i32, %arg1: i32) -> (i32, i32, i32) {
    %c0_i32 = arith.constant 0 : i32
    %c0_i32_0 = arith.constant 0 : i32
    %c0_i32_1 = arith.constant 0 : i32
    return %arg0, %c0_i32, %c0_i32_0 : i32, i32, i32
  }
}

</mosaic_0001>

<llo_original>
// kernel: tpu_custom_call.1
$region0: #{tpu_custom_call.1}
  #allocation0 [shape = 'u32[]', space=smem, size = 0x4, offset = 0x4, fixed_abs, tag = 'smem constant byte address 0x4 - core index']
  #allocation1 [shape = 'u32[72,128]{1,0:T(1,128)}', space=vmem, size = 0x9000, scoped, tag = 'internal scratch']
  #allocation2 [shape = 'f32[4,64]{1,0:T(4,128)}', space=vmem, size = 0x800, scoped, tag = 'scratch operand']
  %s0 = inlined_call_operand.vmem [shape: f32[2,125,64], index: 0, kind: input, shape index: {}]
  %s1 = inlined_call_operand.vmem [shape: f32[2,25,64], index: 1, kind: input, shape index: {}]
  %s2 = inlined_call_operand.vmem [shape: f32[5,2], index: 2, kind: input, shape index: {}]
  %s3 = inlined_call_operand.vmem [shape: f32[2,4,1], index: 3, kind: output, shape index: {}]
  %s4 = sld [smem:[#allocation0]]
  $region53: #{tpu_custom_call.1} parent=0
    _
  %s6 = ssub.s32 1, %s4
  %s7 = scalar_select 0, %s6, %s4
  loop: start=0, step=1, limit=4
  $region2: #{tpu_custom_call.1} parent=0 // loop_pre_header
    _
  $region3: #{tpu_custom_call.1} parent=0 // loop_header
    %s9 = sphi 0, %s13
    %p10 = scmp.ge.s32.totalorder %s9, 4
    %s16 = sphi 0, %s28
    %s17 = sphi 0, %s24
    %s18 = sphi 0, %s16
    %s19 = sphi 0, %s17
    %s20 = sphi 0, %s18
    %s21 = sphi 0, %s19
    %s33 = sphi 0, %s35
    %s36 = sphi 0, %s33
    %s37 = sphi 0, %s36
    %s53 = sphi 0, %s37
    %s61 = sphi 0, %s63
    %s64 = sphi 0, %s61
    %s65 = sphi 0, %s64
    %s81 = sphi 0, %s65
    %s85 = sphi 0, %s85
    %s87 = sphi 0, %s85
    %s88 = sphi 0, %s87
    %s102 = sphi 0, %s88
    %s108 = sphi 0, %s110
    %s111 = sphi 0, %s108
    %s112 = sphi 0, %s111
    %s128 = sphi 0, %s112
  $region4: #{tpu_custom_call.1} parent=0 // loop_header_branch
    %12 = sbr.rel (%p10) target = $region8
  $region5: #{tpu_custom_call.1} parent=0 // loop_body
    %s14 = ssub.s32 %s9, 1
    %s15 = ssub.s32 %s9, 2
    %s22 = sadd.s32 1, %s17
    %p23 = scmp.ge.s32.totalorder %s22, 1
    %s24 = scalar_select %p23, 0, %s22
    %s25 = sadd.s32 1, %s16
    %s26 = scalar_select %p23, %s25, %s16
    %p27 = scmp.ge.s32.totalorder %s26, 2
    %s28 = scalar_select %p27, 0, %s26
    %s29 = ssub.s32 %s16, %s28
    %s30 = ssub.s32 %s17, %s24
    %s31 = sor.u32 %s29, %s30
    %p32 = scmp.eq.s32.totalorder %s31, 0
    %s34 = sadd.s32 %s33, 1
    %s35 = scalar_select %p32, %s33, %s34
    %p38 = pneg %p32
    %p39 = scmp.eq.s32.totalorder %s9, 1
    %p40 = por %p38, %p39
    %p41 = scmp.ne.s32.totalorder %s33, %s36
    %p42 = scmp.eq.s32.totalorder %s9, 0
    %p43 = por %p41, %p42
    %p44 = scmp.ne.s32.totalorder %s33, %s36
    %p45 = scmp.eq.s32.totalorder %s14, 1
    %p46 = por %p44, %p45
    %p47 = scmp.ne.s32.totalorder %s36, %s37
    %p48 = scmp.eq.s32.totalorder %s14, 0
    %p49 = por %p47, %p48
    %p50 = scmp.ne.s32.totalorder %s36, %s37
    %p51 = scmp.eq.s32.totalorder %s15, 1
    %p52 = por %p50, %p51
    %p54 = scmp.ne.s32.totalorder %s37, %s53
    %p55 = scmp.eq.s32.totalorder %s15, 0
    %p56 = por %p54, %p55
    %s57 = ssub.s32 %s16, %s28
    %s58 = ssub.s32 %s17, %s24
    %s59 = sor.u32 %s57, %s58
    %p60 = scmp.eq.s32.totalorder %s59, 0
    %s62 = sadd.s32 %s61, 1
    %s63 = scalar_select %p60, %s61, %s62
    %p66 = pneg %p60
    %p67 = scmp.eq.s32.totalorder %s9, 1
    %p68 = por %p66, %p67
    %p69 = scmp.ne.s32.totalorder %s61, %s64
    %p70 = scmp.eq.s32.totalorder %s9, 0
    %p71 = por %p69, %p70
    %p72 = scmp.ne.s32.totalorder %s61, %s64
    %p73 = scmp.eq.s32.totalorder %s14, 1
    %p74 = por %p72, %p73
    %p75 = scmp.ne.s32.totalorder %s64, %s65
    %p76 = scmp.eq.s32.totalorder %s14, 0
    %p77 = por %p75, %p76
    %p78 = scmp.ne.s32.totalorder %s64, %s65
    %p79 = scmp.eq.s32.totalorder %s15, 1
    %p80 = por %p78, %p79
    %p82 = scmp.ne.s32.totalorder %s65, %s81
    %p83 = scmp.eq.s32.totalorder %s15, 0
    %p84 = por %p82, %p83
    %s86 = sadd.s32 %s85, 1
    %p89 = scmp.eq.s32.totalorder %s9, 1
    %p90 = scmp.ne.s32.totalorder %s85, %s87
    %p91 = scmp.eq.s32.totalorder %s9, 0
    %p92 = por %p90, %p91
    %p93 = scmp.ne.s32.totalorder %s85, %s87
    %p94 = scmp.eq.s32.totalorder %s14, 1
    %p95 = por %p93, %p94
    %p96 = scmp.ne.s32.totalorder %s87, %s88
    %p97 = scmp.eq.s32.totalorder %s14, 0
    %p98 = por %p96, %p97
    %p99 = scmp.ne.s32.totalorder %s87, %s88
    %p100 = scmp.eq.s32.totalorder %s15, 1
    %p101 = por %p99, %p100
    %p103 = scmp.ne.s32.totalorder %s88, %s102
    %p104 = scmp.eq.s32.totalorder %s15, 0
    %p105 = por %p103, %p104
    %s106 = ssub.s32 %s16, %s28
    %p107 = scmp.eq.s32.totalorder %s106, 0
    %s109 = sadd.s32 %s108, 1
    %s110 = scalar_select %p107, %s108, %s109
    %p113 = pneg %p107
    %p114 = scmp.eq.s32.totalorder %s9, 1
    %p115 = por %p113, %p114
    %p116 = scmp.ne.s32.totalorder %s108, %s111
    %p117 = scmp.eq.s32.totalorder %s9, 0
    %p118 = por %p116, %p117
    %p119 = scmp.ne.s32.totalorder %s108, %s111
    %p120 = scmp.eq.s32.totalorder %s14, 1
    %p121 = por %p119, %p120
    %p122 = scmp.ne.s32.totalorder %s111, %s112
    %p123 = scmp.eq.s32.totalorder %s14, 0
    %p124 = por %p122, %p123
    %p125 = scmp.ne.s32.totalorder %s111, %s112
    %p126 = scmp.eq.s32.totalorder %s15, 1
    %p127 = por %p125, %p126
    %p129 = scmp.ne.s32.totalorder %s112, %s128
    %p130 = scmp.eq.s32.totalorder %s15, 0
    %p131 = por %p129, %p130
    %p132 = scmp.le.s32.totalorder 1, %s9
    %p133 = scmp.lt.s32.totalorder %s9, 3
    %p134 = pnand %p132, %p133
    %p135 = pneg %p134
    // Predicated region
    $region9: #{tpu_custom_call.1} parent=5 // pred_check
      _
    $region10: #{tpu_custom_call.1} parent=5 // pred_check_branch
      %137 = sbr.rel (%p134) target = $region12
    $region11: #{tpu_custom_call.1} parent=5 // pred_region
      %s138 = ssub.s32 %s9, 1
      // Predicated region
      $region13: #{tpu_custom_call.1} parent=11 // pred_check
        %p139 = pneg %p98
      $region14: #{tpu_custom_call.1} parent=11 // pred_check_branch
        %141 = sbr.rel (%p139) target = $region16
      $region15: #{tpu_custom_call.1} parent=11 // pred_region
        _
      $region16: #{tpu_custom_call.1} parent=11 // pred_fallthru
        _
    $region12: #{tpu_custom_call.1} parent=5 // pred_fallthru
      _
    %p142 = scmp.lt.s32.totalorder %s9, 2
    // Predicated region
    $region17: #{tpu_custom_call.1} parent=5 // pred_check
      %p143 = pneg %p142
    $region18: #{tpu_custom_call.1} parent=5 // pred_check_branch
      %145 = sbr.rel (%p143) target = $region20
    $region19: #{tpu_custom_call.1} parent=5 // pred_region
      // Predicated region
      $region21: #{tpu_custom_call.1} parent=19 // pred_check
        %p146 = pneg %p43
      $region22: #{tpu_custom_call.1} parent=19 // pred_check_branch
        %148 = sbr.rel (%p146) target = $region24
      $region23: #{tpu_custom_call.1} parent=19 // pred_region
        %p149 = scmp.lt.s32.totalorder %s16, 1
        %s150 = scalar_select %p149, %s16, 1
        %p151 = scmp.lt.s32.totalorder %s17, 0
        %s152 = scalar_select %p151, %s17, 0
        %s153 = smul.addr %s150, 16
        %s154 = sadd.s32 %s152, %s153
        %s155 = smul.addr %s154, 8
        %s156 = scalar_lea.vmem %s0, %s155
      $region24: #{tpu_custom_call.1} parent=19 // pred_fallthru
        _
      // Predicated region
      $region25: #{tpu_custom_call.1} parent=19 // pred_check
        %p157 = pneg %p71
      $region26: #{tpu_custom_call.1} parent=19 // pred_check_branch
        %159 = sbr.rel (%p157) target = $region28
      $region27: #{tpu_custom_call.1} parent=19 // pred_region
        %p160 = scmp.lt.s32.totalorder %s16, 1
        %s161 = scalar_select %p160, %s16, 1
        %p162 = scmp.lt.s32.totalorder %s17, 0
        %s163 = scalar_select %p162, %s17, 0
        %s164 = smul.addr %s161, 4
        %s165 = sadd.s32 %s163, %s164
        %s166 = smul.addr %s165, 8
        %s167 = scalar_lea.vmem %s1, %s166
      $region28: #{tpu_custom_call.1} parent=19 // pred_fallthru
        _
    $region20: #{tpu_custom_call.1} parent=5 // pred_fallthru
      _
    %p168 = scmp.le.s32.totalorder 1, %s9
    %p169 = scmp.lt.s32.totalorder %s9, 3
    %p170 = pnand %p168, %p169
    %p171 = pneg %p170
    // Predicated region
    $region29: #{tpu_custom_call.1} parent=5 // pred_check
      _
    $region30: #{tpu_custom_call.1} parent=5 // pred_check_branch
      %173 = sbr.rel (%p170) target = $region32
    $region31: #{tpu_custom_call.1} parent=5 // pred_region
      %s174 = ssub.s32 %s9, 1
      %p175 = scmp.lt.s32.totalorder %s18, 1
      %s176 = scalar_select %p175, %s18, 1
      %p177 = scmp.lt.s32.totalorder %s19, 0
      %s178 = scalar_select %p177, %s19, 0
      %s179 = smul.addr %s176, 16
      %s180 = sadd.s32 %s178, %s179
      %s181 = smul.addr %s180, 8
      %s182 = scalar_lea.vmem %s0, %s181
      %p183 = pneg %p49
      %p184 = pneg %p46
      %p185 = scmp.lt.s32.totalorder %s18, 1
      %s186 = scalar_select %p185, %s18, 1
      %p187 = scmp.lt.s32.totalorder %s19, 0
      %s188 = scalar_select %p187, %s19, 0
      %s189 = smul.addr %s186, 4
      %s190 = sadd.s32 %s188, %s189
      %s191 = smul.addr %s190, 8
      %s192 = scalar_lea.vmem %s1, %s191
      %p193 = pneg %p77
      %p194 = pneg %p74
      %p195 = pneg %p98
      %p196 = pneg %p95
      %p197 = pneg %p124
      %p198 = pneg %p121
      %p199 = scmp.lt.s32.totalorder %s18, 1
      %s200 = scalar_select %p199, %s18, 1
      %s201 = smul.addr %s200, 4
      %s202 = scalar_lea.vmem %s3, %s201
      %p203 = scmp.lt.s32.totalorder %s18, 1
      %s204 = scalar_select %p203, %s18, 1
      %p205 = scmp.lt.s32.totalorder %s19, 0
      %s206 = scalar_select %p205, %s19, 0
      %s207 = smul.addr %s204, 16
      %s208 = sadd.s32 %s206, %s207
      %s209 = smul.addr %s208, 8
      %s210 = scalar_lea.vmem %s0, %s209
      %p211 = scmp.lt.s32.totalorder %s18, 1
      %s212 = scalar_select %p211, %s18, 1
      %p213 = scmp.lt.s32.totalorder %s19, 0
      %s214 = scalar_select %p213, %s19, 0
      %s215 = smul.addr %s212, 4
      %s216 = sadd.s32 %s214, %s215
      %s217 = smul.addr %s216, 8
      %s218 = scalar_lea.vmem %s1, %s217
      %p219 = scmp.lt.s32.totalorder %s18, 1
      %s220 = scalar_select %p219, %s18, 1
      %s221 = smul.addr %s220, 4
      %s222 = scalar_lea.vmem %s3, %s221
      %p223 = scmp.eq.s32.totalorder %s19, 0
      // Predicated region
      $region33: #{tpu_custom_call.1} parent=31 // pred_check
        %p224 = pneg %p223
      $region34: #{tpu_custom_call.1} parent=31 // pred_check_branch
        %226 = sbr.rel (%p224) target = $region36
      $region35: #{tpu_custom_call.1} parent=31 // pred_region
        %vm227 = vcmask 519168
        %228 = vst.msk [vmem:[#allocation2] sm:$0xf] %vm227, 0.0
      $region36: #{tpu_custom_call.1} parent=31 // pred_fallthru
        _
      %v229 = vld [vmem:[%s218 + $0x14] sm:$0x1]
      %v230 = vld [vmem:[%s218 + $0x15] sm:$0x1]
      %v231 = vld [vmem:[%s218 + $0x16] sm:$0x1]
      %v232 = vld [vmem:[%s218 + $0x17] sm:$0x1]
      %v233 = vld [vmem:[%s218 + $0x18] sm:$0x1]
      %v234 = vld [vmem:[%s218] sm:$0xff]
      %v235 = vld [vmem:[%s218 + $0x8] sm:$0xff]
      %v236 = vld [vmem:[%s218 + $0x10] sm:$0xf]
      %v237 = vrsqrt.pop %v232
      %v238 = vmul.f32 %v237, %v232
      %v239 = vmul.f32 %v238, %v237
      %v240 = vmul.f32 0.5, %v239
      %v241 = vsub.f32 1.5, %v240
      %v242 = vmul.f32 %v237, %v241
      %v243 = vmul.f32 %v232, %v242
      %vm244 = vcmp.eq.f32.partialorder %v232, inf
      %v245 = vsel %vm244, %v232, %v243
      %vm246 = vcmp.eq.f32.partialorder %v232, 0.0
      %v247 = vand.u32 %v232, 2147483648
      %v248 = vsel %vm246, %v247, %v245
      %v249 = vrsqrt.pop %v233
      %v250 = vmul.f32 %v249, %v233
      %v251 = vmul.f32 %v250, %v249
      %v252 = vmul.f32 0.5, %v251
      %v253 = vsub.f32 1.5, %v252
      %v254 = vmul.f32 %v249, %v253
      %v255 = vmul.f32 %v233, %v254
      %vm256 = vcmp.eq.f32.partialorder %v233, inf
      %v257 = vsel %vm256, %v233, %v255
      %vm258 = vcmp.eq.f32.partialorder %v233, 0.0
      %v259 = vand.u32 %v233, 2147483648
      %v260 = vsel %vm258, %v259, %v257
      %vm261 = vcmp.gt.f32.partialorder %v229, 0.0
      %v262 = vsel %vm261, 1, 0
      %v263 = vcvt.s32.f32 %v262
      %s264 = scalar_lea.vmem %s210, 20
      %v265 = vld [vmem:[%s264] ss:$25 sm:$0x1f]
      %s266 = scalar_lea.vmem %s210, 21
      %v267 = vld [vmem:[%s266] ss:$25 sm:$0x1f]
      %s268 = scalar_lea.vmem %s210, 22
      %v269 = vld [vmem:[%s268] ss:$25 sm:$0x1f]
      %s270 = scalar_lea.vmem %s210, 23
      %v271 = vld [vmem:[%s270] ss:$25 sm:$0x1f]
      %s272 = scalar_lea.vmem %s210, 24
      %v273 = vld [vmem:[%s272] ss:$25 sm:$0x1f]
      %v274 = vxor.u32 %v265, 2147483648
      %v275 = vmul.f32 %v274, 1.442695
      %v276 = vpow.pop %v275
      %v277 = vadd.f32 %v276, 1.0
      %v278 = vrcp.pop %v277
      %v279 = vmul.f32 %v277, %v278
      %v280 = vsub.f32 1.0, %v279
      %v281 = vmul.f32 %v278, %v280
      %v282 = vadd.f32 %v278, %v281
      %vm283 = vweird.f32 %v277
      %vm284 = vweird.f32 %v278
      %vm285 = vmor %vm283, %vm284
      %v286 = vsel %vm285, %v278, %v282
      %v287 = vand.u32 2147483647, %v277
      %vm288 = vcmp.eq.f32.partialorder %v287, 8.507059e+37
      %v289 = vand.u32 %v277, 2147483648
      %v290 = vor.u32 1.1754944e-38, %v289
      %v291 = vsel %vm288, %v290, %v286
      %v292 = vmul.f32 1.0, %v291
      %v293 = vxor.u32 %v267, 2147483648
      %v294 = vmul.f32 %v293, 1.442695
      %v295 = vpow.pop %v294
      %v296 = vadd.f32 %v295, 1.0
      %v297 = vrcp.pop %v296
      %v298 = vmul.f32 %v296, %v297
      %v299 = vsub.f32 1.0, %v298
      %v300 = vmul.f32 %v297, %v299
      %v301 = vadd.f32 %v297, %v300
      %vm302 = vweird.f32 %v296
      %vm303 = vweird.f32 %v297
      %vm304 = vmor %vm302, %vm303
      %v305 = vsel %vm304, %v297, %v301
      %v306 = vand.u32 2147483647, %v296
      %vm307 = vcmp.eq.f32.partialorder %v306, 8.507059e+37
      %v308 = vand.u32 %v296, 2147483648
      %v309 = vor.u32 1.1754944e-38, %v308
      %v310 = vsel %vm307, %v309, %v305
      %v311 = vmul.f32 1.0, %v310
      %v312 = vxor.u32 %v269, 2147483648
      %v313 = vmul.f32 %v312, 1.442695
      %v314 = vpow.pop %v313
      %v315 = vadd.f32 %v314, 1.0
      %v316 = vrcp.pop %v315
      %v317 = vmul.f32 %v315, %v316
      %v318 = vsub.f32 1.0, %v317
      %v319 = vmul.f32 %v316, %v318
      %v320 = vadd.f32 %v316, %v319
      %vm321 = vweird.f32 %v315
      %vm322 = vweird.f32 %v316
      %vm323 = vmor %vm321, %vm322
      %v324 = vsel %vm323, %v316, %v320
      %v325 = vand.u32 2147483647, %v315
      %vm326 = vcmp.eq.f32.partialorder %v325, 8.507059e+37
      %v327 = vand.u32 %v315, 2147483648
      %v328 = vor.u32 1.1754944e-38, %v327
      %v329 = vsel %vm326, %v328, %v324
      %v330 = vmul.f32 1.0, %v329
      %v331 = vld [vmem:[%s2] sm:$0x1f]
      %v332 = vrsqrt.pop %v331
      %v333 = vmul.f32 %v332, %v331
      %v334 = vmul.f32 %v333, %v332
      %v335 = vmul.f32 0.5, %v334
      %v336 = vsub.f32 1.5, %v335
      %v337 = vmul.f32 %v332, %v336
      %v338 = vmul.f32 %v331, %v337
      %vm339 = vcmp.eq.f32.partialorder %v331, inf
      %v340 = vsel %vm339, %v331, %v338
      %vm341 = vcmp.eq.f32.partialorder %v331, 0.0
      %v342 = vand.u32 %v331, 2147483648
      %v343 = vsel %vm341, %v342, %v340
      %v344 = vmul.f32 %v271, 0.5
      %v345 = vmul.f32 %v344, 1.442695
      %v346 = vpow.pop %v345
      %348 = vset.pattern.permute.xlu0 0
      %349 = vperm.xlu0 %348, %v343
      %v350 = vpop.permute.xlu0 %349
      %v352 = vmul.f32 %v346, %v350
      %v353 = vmul.f32 %v273, 0.5
      %v354 = vmul.f32 %v353, 1.442695
      %v355 = vpow.pop %v354
      %356 = vset.pattern.permute.xlu0 1
      %357 = vperm.xlu0 %356, %v343
      %v358 = vpop.permute.xlu0 %357
      %v360 = vmul.f32 %v355, %v358
      %v361 = vmul.f32 %v352, %v352
      %v362 = vmul.f32 %v360, %v360
      %v363 = vmul.f32 %v361, 0.5
      %v364 = vadd.f32 %v311, %v363
      %v365 = vmul.f32 %v232, 0.5
      %v366 = vadd.f32 %v230, %v365
      %v367 = vperm.slane %v366, 0
      %v368 = vmin.f32 %v364, %v367
      %v369 = vsub.f32 %v311, %v363
      %v370 = vsub.f32 %v230, %v365
      %v371 = vperm.slane %v370, 0
      %v372 = vmax.f32 %v369, %v371
      %v373 = vsub.f32 %v368, %v372
      %v374 = vmax.f32 %v373, 0.0
      %v375 = vmul.f32 %v362, 0.5
      %v376 = vadd.f32 %v330, %v375
      %v377 = vmul.f32 %v233, 0.5
      %v378 = vadd.f32 %v231, %v377
      %v379 = vperm.slane %v378, 0
      %v380 = vmin.f32 %v376, %v379
      %v381 = vsub.f32 %v330, %v375
      %v382 = vsub.f32 %v231, %v377
      %v383 = vperm.slane %v382, 0
      %v384 = vmax.f32 %v381, %v383
      %v385 = vsub.f32 %v380, %v384
      %v386 = vmax.f32 %v385, 0.0
      %v387 = vmul.f32 %v374, %v386
      %v388 = vmul.f32 %v361, %v362
      %v389 = vmul.f32 %v232, %v233
      %v390 = vperm.slane %v389, 0
      %v391 = vadd.f32 %v388, %v390
      %v392 = vsub.f32 %v391, %v387
      %v393 = vmax.f32 %v392, 1e-10
      %v394 = vrcp.pop %v393
      %v395 = vmul.f32 %v393, %v394
      %v396 = vsub.f32 1.0, %v395
      %v397 = vmul.f32 %v394, %v396
      %v398 = vadd.f32 %v394, %v397
      %vm399 = vweird.f32 %v393
      %vm400 = vweird.f32 %v394
      %vm401 = vmor %vm399, %vm400
      %v402 = vsel %vm401, %v394, %v398
      %v403 = vand.u32 2147483647, %v393
      %vm404 = vcmp.eq.f32.partialorder %v403, 8.507059e+37
      %v405 = vand.u32 %v393, 2147483648
      %v406 = vor.u32 1.1754944e-38, %v405
      %v407 = vsel %vm404, %v406, %v402
      %v408 = vmul.f32 %v387, %v407
      %v409 = vlaneseq
      %v410 = vshrl.u32 %v409, 7
      %vm411 = vcmask 520192
      %v412 = vsel %vm411, %v408, -inf
      %v413 = vrot.slane %v412, 4
      %v414 = vmax.f32 %v412, %v413
      %v415 = vrot.slane %v414, 2
      %v416 = vmax.f32 %v414, %v415
      %v417 = vrot.slane %v416, 1
      %v418 = vmax.f32 %v416, %v417
      %vm419 = vcmp.ge.f32.partialorder %v408, %v418
      %v420 = vsel %vm419, %v410, 5
      %v421 = vsel %vm411, %v420, 2147483647
      %v422 = vrot.slane %v421, 4
      %vm423 = vcmp.lt.s32.totalorder %v421, %v422
      %v424 = vsel %vm423, %v421, %v422
      %v425 = vrot.slane %v424, 2
      %vm426 = vcmp.lt.s32.totalorder %v424, %v425
      %v427 = vsel %vm426, %v424, %v425
      %v428 = vrot.slane %v427, 1
      %vm429 = vcmp.lt.s32.totalorder %v427, %v428
      %v430 = vsel %vm429, %v427, %v428
      %vm431 = vcmp.eq.s32.totalorder %v410, %v430
      %v432 = vsel %vm431, 1, 0
      %v433 = vcvt.s32.f32 %v432
      %v434 = vperm.slane %v263, 0
      %v435 = vmul.f32 %v433, %v434
      %v436 = vperm.slane %v230, 0
      %v437 = vsub.f32 %v311, %v436
      %v438 = vperm.slane %v231, 0
      %v439 = vsub.f32 %v330, %v438
      %v440 = vperm.slane %v248, 0
      %v441 = vsub.f32 %v352, %v440
      %v442 = vperm.slane %v260, 0
      %v443 = vsub.f32 %v360, %v442
      %v444 = vmul.f32 %v437, %v437
      %v445 = vmul.f32 %v439, %v439
      %v446 = vadd.f32 %v444, %v445
      %v447 = vmul.f32 %v441, %v441
      %v448 = vadd.f32 %v446, %v447
      %v449 = vmul.f32 %v443, %v443
      %v450 = vadd.f32 %v448, %v449
      %v451 = vmul.f32 %v450, %v435
      %v452 = vsel %vm411, %v451, 0.0
      %v453 = vrot.slane %v452, 4
      %v454 = vadd.f32 %v452, %v453
      %v455 = vrot.slane %v454, 2
      %v456 = vadd.f32 %v454, %v455
      %v457 = vrot.slane %v456, 1
      %v458 = vadd.f32 %v456, %v457
      %v459 = vperm.slane %v229, 0
      %v460 = vsub.f32 %v292, %v459
      %v461 = vmul.f32 %v460, %v460
      %v462 = vmul.f32 %v461, %v435
      %v463 = vsel %vm411, %v462, 0.0
      %v464 = vrot.slane %v463, 4
      %v465 = vadd.f32 %v463, %v464
      %v466 = vrot.slane %v465, 2
      %v467 = vadd.f32 %v465, %v466
      %v468 = vrot.slane %v467, 1
      %v469 = vadd.f32 %v467, %v468
      %v470 = vmul.f32 %v292, %v292
      %v471 = vsub.f32 1.0, %v435
      %v472 = vmul.f32 %v470, %v471
      %v473 = vsel %vm411, %v472, 0.0
      %v474 = vrot.slane %v473, 4
      %v475 = vadd.f32 %v473, %v474
      %v476 = vrot.slane %v475, 2
      %v477 = vadd.f32 %v475, %v476
      %v478 = vrot.slane %v477, 1
      %v479 = vadd.f32 %v477, %v478
      %v480 = vld [vmem:[%s210] sm:$0xff]
      %v481 = vld [vmem:[%s210 + $0x8] sm:$0xff]
      %v482 = vld [vmem:[%s210 + $0x10] sm:$0xf]
      %v483 = vperm.slane %v435, 0
      %v484 = vmul.f32 %v480, %v483
      %v485 = vmul.f32 %v481, %v483
      %v486 = vmul.f32 %v482, %v483
      %v487 = vld [vmem:[%s210 + $0x19] sm:$0xff]
      %v488 = vld [vmem:[%s210 + $0x21] sm:$0xff]
      %v489 = vld [vmem:[%s210 + $0x29] sm:$0xf]
      %v490 = vperm.slane %v435, 1
      %v491 = vmul.f32 %v487, %v490
      %v492 = vmul.f32 %v488, %v490
      %v493 = vmul.f32 %v489, %v490
      %v494 = vadd.f32 %v484, %v491
      %v495 = vadd.f32 %v485, %v492
      %v496 = vadd.f32 %v486, %v493
      %v497 = vld [vmem:[%s210 + $0x32] sm:$0xff]
      %v498 = vld [vmem:[%s210 + $0x3a] sm:$0xff]
      %v499 = vld [vmem:[%s210 + $0x42] sm:$0xf]
      %v500 = vperm.slane %v435, 2
      %v501 = vmul.f32 %v497, %v500
      %v502 = vmul.f32 %v498, %v500
      %v503 = vmul.f32 %v499, %v500
      %v504 = vadd.f32 %v494, %v501
      %v505 = vadd.f32 %v495, %v502
      %v506 = vadd.f32 %v496, %v503
      %v507 = vld [vmem:[%s210 + $0x4b] sm:$0xff]
      %v508 = vld [vmem:[%s210 + $0x53] sm:$0xff]
      %v509 = vld [vmem:[%s210 + $0x5b] sm:$0xf]
      %v510 = vperm.slane %v435, 3
      %v511 = vmul.f32 %v507, %v510
      %v512 = vmul.f32 %v508, %v510
      %v513 = vmul.f32 %v509, %v510
      %v514 = vadd.f32 %v504, %v511
      %v515 = vadd.f32 %v505, %v512
      %v516 = vadd.f32 %v506, %v513
      %v517 = vld [vmem:[%s210 + $0x64] sm:$0xff]
      %v518 = vld [vmem:[%s210 + $0x6c] sm:$0xff]
      %v519 = vld [vmem:[%s210 + $0x74] sm:$0xf]
      %v520 = vperm.slane %v435, 4
      %v521 = vmul.f32 %v517, %v520
      %v522 = vmul.f32 %v518, %v520
      %v523 = vmul.f32 %v519, %v520
      %v524 = vadd.f32 %v514, %v521
      %v525 = vadd.f32 %v515, %v522
      %v526 = vadd.f32 %v516, %v523
      %v527 = vadd.s32 %v410, 8
      %v528 = vadd.s32 %v410, 16
      %vm529 = vcmask 523264
      %v530 = vsel %vm529, %v234, -inf
      %v531 = vsel %vm529, %v235, -inf
      %vm532 = vcmask 519168
      %v533 = vsel %vm532, %v236, -inf
      %v534 = vmax.f32 %v530, %v531
      %v535 = vmax.f32 %v534, %v533
      %v536 = vrot.slane %v535, 4
      %v537 = vmax.f32 %v535, %v536
      %v538 = vrot.slane %v537, 2
      %v539 = vmax.f32 %v537, %v538
      %v540 = vrot.slane %v539, 1
      %v541 = vmax.f32 %v539, %v540
      %vm542 = vcmp.ge.f32.partialorder %v234, %v541
      %vm543 = vcmp.ge.f32.partialorder %v235, %v541
      %vm544 = vcmp.ge.f32.partialorder %v236, %v541
      %v545 = vsel %vm542, %v410, 20
      %v546 = vsel %vm543, %v527, 20
      %v547 = vsel %vm544, %v528, 20
      %v548 = vsel %vm529, %v545, 2147483647
      %v549 = vsel %vm529, %v546, 2147483647
      %v550 = vsel %vm532, %v547, 2147483647
      %vm551 = vcmp.lt.s32.totalorder %v548, %v549
      %v552 = vsel %vm551, %v548, %v549
      %vm553 = vcmp.lt.s32.totalorder %v552, %v550
      %v554 = vsel %vm553, %v552, %v550
      %v555 = vrot.slane %v554, 4
      %vm556 = vcmp.lt.s32.totalorder %v554, %v555
      %v557 = vsel %vm556, %v554, %v555
      %v558 = vrot.slane %v557, 2
      %vm559 = vcmp.lt.s32.totalorder %v557, %v558
      %v560 = vsel %vm559, %v557, %v558
      %v561 = vrot.slane %v560, 1
      %vm562 = vcmp.lt.s32.totalorder %v560, %v561
      %v563 = vsel %vm562, %v560, %v561
      %vm564 = vcmp.eq.s32.totalorder %v410, %v563
      %vm565 = vcmp.eq.s32.totalorder %v527, %v563
      %vm566 = vcmp.eq.s32.totalorder %v528, %v563
      %v567 = vsel %vm564, 1, 0
      %v568 = vsel %vm565, 1, 0
      %v569 = vsel %vm566, 1, 0
      %v570 = vcvt.s32.f32 %v567
      %v571 = vcvt.s32.f32 %v568
      %v572 = vcvt.s32.f32 %v569
      %v573 = vsel %vm529, %v524, -inf
      %v574 = vsel %vm529, %v525, -inf
      %v575 = vsel %vm532, %v526, -inf
      %v576 = vmax.f32 %v573, %v574
      %v577 = vmax.f32 %v576, %v575
      %v578 = vrot.slane %v577, 4
      %v579 = vmax.f32 %v577, %v578
      %v580 = vrot.slane %v579, 2
      %v581 = vmax.f32 %v579, %v580
      %v582 = vrot.slane %v581, 1
      %v583 = vmax.f32 %v581, %v582
      %v584 = vsub.f32 %v524, %v583
      %v585 = vsub.f32 %v525, %v583
      %v586 = vsub.f32 %v526, %v583
      %v587 = vmul.f32 %v584, 1.442695
      %v588 = vpow.pop %v587
      %v589 = vmul.f32 %v585, 1.442695
      %v590 = vpow.pop %v589
      %v591 = vmul.f32 %v586, 1.442695
      %v592 = vpow.pop %v591
      %v593 = vsel %vm529, %v588, 0.0
      %v594 = vsel %vm529, %v590, 0.0
      %v595 = vadd.f32 %v593, %v594
      %v596 = vsel %vm532, %v592, 0.0
      %v597 = vadd.f32 %v595, %v596
      %v598 = vrot.slane %v597, 4
      %v599 = vadd.f32 %v597, %v598
      %v600 = vrot.slane %v599, 2
      %v601 = vadd.f32 %v599, %v600
      %v602 = vrot.slane %v601, 1
      %v603 = vadd.f32 %v601, %v602
      %v604 = vlog2.pop %v603
      %v605 = vmul.f32 %v604, 0.6931472
      %v606 = vadd.f32 %v605, %v583
      %v607 = vmul.f32 %v524, %v570
      %v608 = vmul.f32 %v525, %v571
      %v609 = vmul.f32 %v526, %v572
      %v610 = vsel %vm529, %v607, 0.0
      %v611 = vsel %vm529, %v608, 0.0
      %v612 = vadd.f32 %v610, %v611
      %v613 = vsel %vm532, %v609, 0.0
      %v614 = vadd.f32 %v612, %v613
      %v615 = vrot.slane %v614, 4
      %v616 = vadd.f32 %v614, %v615
      %v617 = vrot.slane %v616, 2
      %v618 = vadd.f32 %v616, %v617
      %v619 = vrot.slane %v618, 1
      %v620 = vadd.f32 %v618, %v619
      %v621 = vsub.f32 %v606, %v620
      %v622 = vmul.f32 %v621, %v263
      %v623 = vld [vmem:[#allocation2] sm:$0x1]
      %v624 = vadd.f32 %v623, %v458
      %vm625 = vcmask 516096
      %626 = vst.msk [vmem:[#allocation2] sm:$0x1] %vm625, %v624
      %v627 = vld [vmem:[#allocation2 + $0x1] sm:$0x1]
      %v628 = vadd.f32 %v627, %v469
      %629 = vst.msk [vmem:[#allocation2 + $0x1] sm:$0x1] %vm625, %v628
      %v630 = vld [vmem:[#allocation2 + $0x2] sm:$0x1]
      %v631 = vadd.f32 %v630, %v479
      %632 = vst.msk [vmem:[#allocation2 + $0x2] sm:$0x1] %vm625, %v631
      %v633 = vld [vmem:[#allocation2 + $0x3] sm:$0x1]
      %v634 = vadd.f32 %v633, %v622
      %635 = vst.msk [vmem:[#allocation2 + $0x3] sm:$0x1] %vm625, %v634
      // Predicated region
      $region37: #{tpu_custom_call.1} parent=31 // pred_check
        %p636 = pneg %p223
      $region38: #{tpu_custom_call.1} parent=31 // pred_check_branch
        %638 = sbr.rel (%p636) target = $region40
      $region39: #{tpu_custom_call.1} parent=31 // pred_region
        %v639 = vld [vmem:[#allocation2] sm:$0xf]
        %v640 = vsel %vm532, %v639, 0.0
        %641 = vadd.xlane.f32.xlu0 %v640
        %v642 = vpop.xlane.xlu0 %641
        %vm643 = vcmask 3072
        %644 = vst.msk [vmem:[%s222] sm:$0xf] %vm643, %v642
      $region40: #{tpu_custom_call.1} parent=31 // pred_fallthru
        _
      %p645 = scmp.lt.s32.totalorder %s18, 1
      %s646 = scalar_select %p645, %s18, 1
      %s647 = smul.addr %s646, 4
      %s648 = scalar_lea.vmem %s3, %s647
      // Predicated region
      $region41: #{tpu_custom_call.1} parent=31 // pred_check
        %p649 = pneg %p121
      $region42: #{tpu_custom_call.1} parent=31 // pred_check_branch
        %651 = sbr.rel (%p649) target = $region44
      $region43: #{tpu_custom_call.1} parent=31 // pred_region
        _
      $region44: #{tpu_custom_call.1} parent=31 // pred_fallthru
        _
    $region32: #{tpu_custom_call.1} parent=5 // pred_fallthru
      _
    %p652 = scmp.le.s32.totalorder 2, %s9
    // Predicated region
    $region45: #{tpu_custom_call.1} parent=5 // pred_check
      %p653 = pneg %p652
    $region46: #{tpu_custom_call.1} parent=5 // pred_check_branch
      %655 = sbr.rel (%p653) target = $region48
    $region47: #{tpu_custom_call.1} parent=5 // pred_region
      %s656 = ssub.s32 %s9, 2
      // Predicated region
      $region49: #{tpu_custom_call.1} parent=47 // pred_check
        %p657 = pneg %p127
      $region50: #{tpu_custom_call.1} parent=47 // pred_check_branch
        %659 = sbr.rel (%p657) target = $region52
      $region51: #{tpu_custom_call.1} parent=47 // pred_region
        %p660 = scmp.lt.s32.totalorder %s20, 1
        %s661 = scalar_select %p660, %s20, 1
        %s662 = smul.addr %s661, 4
        %s663 = scalar_lea.vmem %s3, %s662
      $region52: #{tpu_custom_call.1} parent=47 // pred_fallthru
        _
    $region48: #{tpu_custom_call.1} parent=5 // pred_fallthru
      _
  $region6: #{tpu_custom_call.1} parent=0 // loop_footer
    %s13 = sadd.s32 1, %s9
  $region7: #{tpu_custom_call.1} parent=0 // loop_footer_branch
    %8 = sbr.rel target = $region3
  $region8: #{tpu_custom_call.1} parent=0 // loop_exit
    _

</llo_original>
